<compile_context>
chip_gen: v5e
topology: v5e:2x2
jax: 0.10.0
libtpu: 0.0.40
codegen_flags: <defaults>
</compile_context>

<pallas_src>
import functools

import jax
import jax.numpy as jnp
from jax.experimental import pallas as pl
from jax.experimental.pallas import tpu as pltpu


IN_DIM, HID_DIM, OUT_DIM = 784, 256, 10
N_PAD = 128  # lane-dense width for the layer-2 MXU pass / resident W2


def _round_up(x, m):
    return ((x + m - 1) // m) * m


def _choose_tiling(B, tile_b):
    """Adaptive batch tiling.

    - Pad B only up to the 16-row sublane multiple (bf16 in-kernel cast).
    - TILE_B capped at `tile_b` (default 1024) to amortize ~0.35us step cost.
    - Force >= 2 grid steps when B >= 32 so the 'parallel' batch axis can be
      sharded across both v7x TensorCores.
    """
    Bp = _round_up(B, 16)
    n_steps = max(pl.cdiv(Bp, tile_b), 2 if Bp >= 32 else 1)
    tile = _round_up(pl.cdiv(Bp, n_steps), 16)
    Bp = _round_up(Bp, tile)  # keep the grid divisible; pads < one extra tile
    return Bp, tile


def prepare_params(w1, b1, w2, b2):
    """One-time parameter formatting (call once, reuse across forwards).

    bf16 weights for the MXU / halved HBM bytes; layer-2 weight & bias padded
    10 -> 128 lanes so both MXU passes and the bias add are full-vreg.
    """
    h, n = w1.shape[1], w2.shape[1]
    w1_bf = w1.astype(jnp.bfloat16)
    b1_f32 = b1.reshape(1, h).astype(jnp.float32)
    w2_p = jnp.zeros((h, N_PAD), jnp.bfloat16).at[:, :n].set(w2.astype(jnp.bfloat16))
    b2_p = jnp.zeros((1, N_PAD), jnp.float32).at[:, :n].set(
        b2.reshape(1, n).astype(jnp.float32))
    return w1_bf, b1_f32, w2_p, b2_p


def mlp_kernel(x_ref, w1_ref, b1_ref, w2_ref, b2_ref, o_ref):
    # Cast x f32 -> bf16 in-kernel (cheap VPU work hidden under MXU/DMA).
    x_bf = x_ref[...].astype(jnp.bfloat16)
    # Layer 1 on the MXU with f32 accumulation; bias + ReLU in f32 (v5e-safe).
    h = jnp.dot(x_bf, w1_ref[...], preferred_element_type=jnp.float32)
    h = jnp.maximum(h + b1_ref[...], 0.0)                 # (TILE_B, 256) + (1, 256)
    # Layer 2: bf16 activations for the MXU, f32 accumulation, full-vreg bias.
    y = jnp.dot(h.astype(jnp.bfloat16), w2_ref[...],
                preferred_element_type=jnp.float32)        # (TILE_B, 128)
    y = y + b2_ref[...]
    # Narrow store of the true 10 output columns (block dim == full array dim).
    o_ref[...] = y[:, :o_ref.shape[1]].astype(o_ref.dtype)


@functools.partial(jax.jit, static_argnames=("tile_b", "n_out"))
def mlp_forward(x, w1_bf, b1_f32, w2_p, b2_p, *, tile_b=1024, n_out=OUT_DIM):
    B, K = x.shape                 # K = 784
    H = w1_bf.shape[1]             # 256
    n_pad = w2_p.shape[1]          # 128

    Bp, TILE_B = _choose_tiling(B, tile_b)
    if Bp != B:
        # Only batch-dim zero-pad, same dtype; no-op for 16-aligned batches.
        x = jnp.zeros((Bp, K), x.dtype).at[:B].set(x)

    grid = (Bp // TILE_B,)

    flops = 2 * Bp * K * H + 2 * Bp * H * n_pad
    bytes_accessed = (Bp * K * 4            # x (f32, read once in-kernel)
                      + K * H * 2           # w1 (bf16, resident)
                      + H * n_pad * 2       # w2 padded (bf16, resident)
                      + H * 4 + n_pad * 4   # biases (f32)
                      + Bp * n_out * 4)     # narrow f32 output

    out = pl.pallas_call(
        mlp_kernel,
        out_shape=jax.ShapeDtypeStruct((Bp, n_out), jnp.float32),
        grid_spec=pltpu.PrefetchScalarGridSpec(
            num_scalar_prefetch=0,
            grid=grid,
            in_specs=[
                pl.BlockSpec((TILE_B, K), lambda i: (i, 0)),   # x tile streams
                pl.BlockSpec((K, H),      lambda i: (0, 0)),   # W1 resident
                pl.BlockSpec((1, H),      lambda i: (0, 0)),   # b1 resident
                pl.BlockSpec((H, n_pad),  lambda i: (0, 0)),   # W2 resident
                pl.BlockSpec((1, n_pad),  lambda i: (0, 0)),   # b2 resident
            ],
            out_specs=pl.BlockSpec((TILE_B, n_out), lambda i: (i, 0)),
        ),
        compiler_params=pltpu.CompilerParams(
            dimension_semantics=("parallel",),   # shard batch across TCs (v7x)
            vmem_limit_bytes=32 << 20,           # safe on v5e/v6e/v7x
        ),
        cost_estimate=pl.CostEstimate(
            flops=flops, transcendentals=0, bytes_accessed=bytes_accessed),
    )(x, w1_bf, b1_f32, w2_p, b2_p)

    return out[:B]


def init_params(key):
    """Deterministic parameter init mimicking nn.Linear shapes.
    PyTorch stores W as (out, in); we store the transpose (in, out)."""
    k1, k2, k3, k4 = jax.random.split(key, 4)
    s1 = 1.0 / jnp.sqrt(IN_DIM)
    s2 = 1.0 / jnp.sqrt(HID_DIM)
    w1 = jax.random.uniform(k1, (IN_DIM, HID_DIM), jnp.float32, -s1, s1)
    b1 = jax.random.uniform(k2, (1, HID_DIM), jnp.float32, -s1, s1)
    w2 = jax.random.uniform(k3, (HID_DIM, OUT_DIM), jnp.float32, -s2, s2)
    b2 = jax.random.uniform(k4, (1, OUT_DIM), jnp.float32, -s2, s2)
    return w1, b1, w2, b2


if __name__ == "__main__":
    key = jax.random.PRNGKey(0)
    kx, kp = jax.random.split(key)

    B = 32  # small batch; tiling gives a 2-step grid of 16-row tiles
    x = jax.random.normal(kx, (B, IN_DIM), dtype=jnp.float32)
    w1, b1, w2, b2 = init_params(kp)

    # One-time weight formatting (bf16 + layer-2 lane padding).
    params = prepare_params(w1, b1, w2, b2)
    params = jax.tree_util.tree_map(jax.block_until_ready, params)

    out = mlp_forward(x, *params)
    out = jax.block_until_ready(out)

    # Reference emulating the kernel's bf16 casts with f32 accumulation.
    xb = x.astype(jnp.bfloat16).astype(jnp.float32)
    w1b = w1.astype(jnp.bfloat16).astype(jnp.float32)
    w2b = w2.astype(jnp.bfloat16).astype(jnp.float32)
    h_ref = jnp.maximum(xb @ w1b + b1, 0.0)
    h_ref = h_ref.astype(jnp.bfloat16).astype(jnp.float32)
    ref = h_ref @ w2b + b2

    assert out.shape == (B, OUT_DIM)
    assert jnp.allclose(out, ref, atol=1e-2, rtol=1e-2), (
        float(jnp.max(jnp.abs(out - ref))))

    # Also sanity-check against the pure-f32 math (looser, bf16 rounding).
    ref_f32 = jnp.maximum(x @ w1 + b1, 0.0) @ w2 + b2
    assert jnp.allclose(out, ref_f32, atol=5e-2, rtol=5e-2)

    print("KERNEL_OK")
</pallas_src>

<mosaic_0001>
module attributes {stable_mosaic.version = 11 : i64} {
  func.func @mlp_kernel(%arg0: i32, %arg1: memref<16x784xf32, #tpu.memory_space<vmem>>, %arg2: memref<784x256xbf16, #tpu.memory_space<vmem>>, %arg3: memref<1x256xf32, #tpu.memory_space<vmem>>, %arg4: memref<256x128xbf16, #tpu.memory_space<vmem>>, %arg5: memref<1x128xf32, #tpu.memory_space<vmem>>, %arg6: memref<16x10xf32, #tpu.memory_space<vmem>>) attributes {dimension_semantics = [#tpu.dimension_semantics<parallel>], iteration_bounds = array<i64: 2>, scalar_prefetch = 0 : i64, scratch_operands = 0 : i64, tpu.core_type = #tpu.core_type<tc>, window_params = [{transform_indices = @transform_0, window_bounds = array<i64: 16, 784>}, {pipeline_mode = #tpu.pipeline_mode<synchronous>, transform_indices = @transform_1, window_bounds = array<i64: 784, 256>}, {pipeline_mode = #tpu.pipeline_mode<synchronous>, transform_indices = @transform_2, window_bounds = array<i64: 1, 256>}, {pipeline_mode = #tpu.pipeline_mode<synchronous>, transform_indices = @transform_3, window_bounds = array<i64: 256, 128>}, {pipeline_mode = #tpu.pipeline_mode<synchronous>, transform_indices = @transform_4, window_bounds = array<i64: 1, 128>}, {transform_indices = @transform_5, window_bounds = array<i64: 16, 10>}]} {
    %c0 = arith.constant 0 : index
    %c0_0 = arith.constant 0 : index
    %0 = vector.load %arg1[%c0, %c0_0] : memref<16x784xf32, #tpu.memory_space<vmem>>, vector<16x784xf32>
    %1 = arith.truncf %0 : vector<16x784xf32> to vector<16x784xbf16>
    %c0_1 = arith.constant 0 : index
    %c0_2 = arith.constant 0 : index
    %2 = vector.load %arg2[%c0_1, %c0_2] : memref<784x256xbf16, #tpu.memory_space<vmem>>, vector<784x256xbf16>
    %cst = arith.constant dense<0.000000e+00> : vector<16x256xf32>
    %3 = tpu.matmul %1, %2, %cst {dimension_numbers = #tpu.dot_dimension_numbers<[1], [0], [0], [1], [0, 0, 1, 1], [], []>} : vector<16x784xbf16>, vector<784x256xbf16>, vector<16x256xf32> -> vector<16x256xf32>
    %c0_3 = arith.constant 0 : index
    %c0_4 = arith.constant 0 : index
    %4 = vector.load %arg3[%c0_3, %c0_4] : memref<1x256xf32, #tpu.memory_space<vmem>>, vector<1x256xf32>
    %5 = vector.broadcast %4 : vector<1x256xf32> to vector<16x256xf32>
    %6 = arith.addf %3, %5 : vector<16x256xf32>
    %cst_5 = arith.constant 0.000000e+00 : f32
    %7 = vector.broadcast %cst_5 : f32 to vector<16x256xf32>
    %8 = arith.maximumf %6, %7 : vector<16x256xf32>
    %9 = arith.truncf %8 : vector<16x256xf32> to vector<16x256xbf16>
    %c0_6 = arith.constant 0 : index
    %c0_7 = arith.constant 0 : index
    %10 = vector.load %arg4[%c0_6, %c0_7] : memref<256x128xbf16, #tpu.memory_space<vmem>>, vector<256x128xbf16>
    %cst_8 = arith.constant dense<0.000000e+00> : vector<16x128xf32>
    %11 = tpu.matmul %9, %10, %cst_8 {dimension_numbers = #tpu.dot_dimension_numbers<[1], [0], [0], [1], [0, 0, 1, 1], [], []>} : vector<16x256xbf16>, vector<256x128xbf16>, vector<16x128xf32> -> vector<16x128xf32>
    %c0_9 = arith.constant 0 : index
    %c0_10 = arith.constant 0 : index
    %12 = vector.load %arg5[%c0_9, %c0_10] : memref<1x128xf32, #tpu.memory_space<vmem>>, vector<1x128xf32>
    %13 = vector.broadcast %12 : vector<1x128xf32> to vector<16x128xf32>
    %14 = arith.addf %11, %13 : vector<16x128xf32>
    %15 = vector.extract_strided_slice %14 {offsets = [0, 0], sizes = [16, 10], strides = [1, 1]} : vector<16x128xf32> to vector<16x10xf32>
    %c0_11 = arith.constant 0 : index
    %c0_12 = arith.constant 0 : index
    %16 = vector.load %arg6[%c0_11, %c0_12] : memref<16x10xf32, #tpu.memory_space<vmem>>, vector<16x10xf32>
    tpu.vector_store %arg6[%c0_11, %c0_12], %15 {strides = array<i32>} : memref<16x10xf32, #tpu.memory_space<vmem>>, vector<16x10xf32>,
    return
  }
  func.func @transform_0(%arg0: i32) -> (i32, i32) {
    %c0_i32 = arith.constant 0 : i32
    %c0_i32_0 = arith.constant 0 : i32
    return %arg0, %c0_i32 : i32, i32
  }
  func.func @transform_1(%arg0: i32) -> (i32, i32) {
    %c0_i32 = arith.constant 0 : i32
    %c0_i32_0 = arith.constant 0 : i32
    %c0_i32_1 = arith.constant 0 : i32
    return %c0_i32, %c0_i32_0 : i32, i32
  }
  func.func @transform_2(%arg0: i32) -> (i32, i32) {
    %c0_i32 = arith.constant 0 : i32
    %c0_i32_0 = arith.constant 0 : i32
    %c0_i32_1 = arith.constant 0 : i32
    return %c0_i32, %c0_i32_0 : i32, i32
  }
  func.func @transform_3(%arg0: i32) -> (i32, i32) {
    %c0_i32 = arith.constant 0 : i32
    %c0_i32_0 = arith.constant 0 : i32
    %c0_i32_1 = arith.constant 0 : i32
    return %c0_i32, %c0_i32_0 : i32, i32
  }
  func.func @transform_4(%arg0: i32) -> (i32, i32) {
    %c0_i32 = arith.constant 0 : i32
    %c0_i32_0 = arith.constant 0 : i32
    %c0_i32_1 = arith.constant 0 : i32
    return %c0_i32, %c0_i32_0 : i32, i32
  }
  func.func @transform_5(%arg0: i32) -> (i32, i32) {
    %c0_i32 = arith.constant 0 : i32
    %c0_i32_0 = arith.constant 0 : i32
    return %arg0, %c0_i32 : i32, i32
  }
}

</mosaic_0001>

<llo_original>
// kernel: mlp_forward.1
$region0: #{mlp_forward.1}
  #allocation0 [shape = 'u32[]', space=smem, size = 0x4, offset = 0x4, fixed_abs, tag = 'smem constant byte address 0x4 - core index']
  #allocation1 [shape = 'u32[72,128]{1,0:T(1,128)}', space=vmem, size = 0x9000, scoped, tag = 'internal scratch']
  %s0 = inlined_call_operand.hbm [shape: f32[32,784], index: 0, kind: input, shape index: {}]
  %s1 = inlined_call_operand.hbm [shape: bf16[784,256], index: 1, kind: input, shape index: {}]
  %s2 = inlined_call_operand.hbm [shape: f32[1,256], index: 2, kind: input, shape index: {}]
  %s3 = inlined_call_operand.hbm [shape: bf16[256,128], index: 3, kind: input, shape index: {}]
  %s4 = inlined_call_operand.vmem [shape: f32[1,128], index: 4, kind: input, shape index: {}]
  %s5 = inlined_call_operand.vmem [shape: f32[32,10], index: 5, kind: output, shape index: {}]
  %s6 = sld [smem:[#allocation0]]
  $region69: #{mlp_forward.1} parent=0
    _
  %s8 = ssub.s32 1, %s6
  %s9 = scalar_select 0, %s8, %s6
  $region1: #{mlp_forward.1} parent=0
    #allocation2 [shape = 'u8[114688]{0}', space=vmem, size = 0x1c000, scoped, tag = 'input window, operand 0']
    #allocation3 [shape = 's32[2]{0}', space=sflag, size = 0x8, scoped, tag = 'scoped memory for mlp_forward.1']
    #allocation4 [shape = 'u8[401408]{0}', space=vmem, size = 0x62000, scoped, tag = 'input window, operand 1, single buffered']
    #allocation5 [shape = 's32[1]{0}', space=sflag, size = 0x4, scoped, tag = 'scoped memory for mlp_forward.1']
    #allocation6 [shape = 'u8[1024]{0}', space=vmem, size = 0x400, scoped, tag = 'input window, operand 2, single buffered']
    #allocation7 [shape = 'u8[65536]{0}', space=vmem, size = 0x10000, scoped, tag = 'input window, operand 3, single buffered']
    #allocation8 [shape = 's32[1]{0}', space=sflag, size = 0x4, scoped, tag = 'scoped memory for mlp_forward.1']
    %10 = vsyncpa [#allocation3], 0
    %s11 = scalar_lea.sflag [#allocation3], 1
    %12 = vsyncpa %s11, 0
    %13 = vsyncpa [#allocation5], 0
    %14 = vsyncpa [#allocation8], 0
    loop: start=0, step=1, limit=4
    $region2: #{mlp_forward.1} parent=1 // loop_pre_header
      _
    $region3: #{mlp_forward.1} parent=1 // loop_header
      %s16 = sphi 0, %s20
      %p17 = scmp.ge.s32.totalorder %s16, 4
      %s26 = sphi 0, %s28
      %s29 = sphi 0, %s26
      %s30 = sphi 0, %s29
      %s46 = sphi 0, %s30
      %s50 = sphi 0, %s50
      %s52 = sphi 0, %s50
      %s53 = sphi 0, %s52
      %s67 = sphi 0, %s53
      %s71 = sphi 0, %s71
      %s73 = sphi 0, %s71
      %s74 = sphi 0, %s73
      %s88 = sphi 0, %s74
      %s92 = sphi 0, %s92
      %s94 = sphi 0, %s92
      %s95 = sphi 0, %s94
      %s109 = sphi 0, %s95
      %s113 = sphi 0, %s113
      %s115 = sphi 0, %s113
      %s116 = sphi 0, %s115
      %s130 = sphi 0, %s116
      %s136 = sphi 0, %s138
      %s139 = sphi 0, %s136
      %s140 = sphi 0, %s139
      %s156 = sphi 0, %s140
    $region4: #{mlp_forward.1} parent=1 // loop_header_branch
      %19 = sbr.rel (%p17) target = $region8
    $region5: #{mlp_forward.1} parent=1 // loop_body
      %s21 = ssub.s32 %s16, 1
      %s22 = ssub.s32 %s16, 2
      %s23 = sadd.s32 %s16, 1
      %s24 = ssub.s32 %s16, %s23
      %p25 = scmp.eq.s32.totalorder %s24, 0
      %s27 = sadd.s32 %s26, 1
      %s28 = scalar_select %p25, %s26, %s27
      %p31 = pneg %p25
      %p32 = scmp.eq.s32.totalorder %s16, 1
      %p33 = por %p31, %p32
      %p34 = scmp.ne.s32.totalorder %s26, %s29
      %p35 = scmp.eq.s32.totalorder %s16, 0
      %p36 = por %p34, %p35
      %p37 = scmp.ne.s32.totalorder %s26, %s29
      %p38 = scmp.eq.s32.totalorder %s21, 1
      %p39 = por %p37, %p38
      %p40 = scmp.ne.s32.totalorder %s29, %s30
      %p41 = scmp.eq.s32.totalorder %s21, 0
      %p42 = por %p40, %p41
      %p43 = scmp.ne.s32.totalorder %s29, %s30
      %p44 = scmp.eq.s32.totalorder %s22, 1
      %p45 = por %p43, %p44
      %p47 = scmp.ne.s32.totalorder %s30, %s46
      %p48 = scmp.eq.s32.totalorder %s22, 0
      %p49 = por %p47, %p48
      %s51 = sadd.s32 %s50, 1
      %p54 = scmp.eq.s32.totalorder %s16, 1
      %p55 = scmp.ne.s32.totalorder %s50, %s52
      %p56 = scmp.eq.s32.totalorder %s16, 0
      %p57 = por %p55, %p56
      %p58 = scmp.ne.s32.totalorder %s50, %s52
      %p59 = scmp.eq.s32.totalorder %s21, 1
      %p60 = por %p58, %p59
      %p61 = scmp.ne.s32.totalorder %s52, %s53
      %p62 = scmp.eq.s32.totalorder %s21, 0
      %p63 = por %p61, %p62
      %p64 = scmp.ne.s32.totalorder %s52, %s53
      %p65 = scmp.eq.s32.totalorder %s22, 1
      %p66 = por %p64, %p65
      %p68 = scmp.ne.s32.totalorder %s53, %s67
      %p69 = scmp.eq.s32.totalorder %s22, 0
      %p70 = por %p68, %p69
      %s72 = sadd.s32 %s71, 1
      %p75 = scmp.eq.s32.totalorder %s16, 1
      %p76 = scmp.ne.s32.totalorder %s71, %s73
      %p77 = scmp.eq.s32.totalorder %s16, 0
      %p78 = por %p76, %p77
      %p79 = scmp.ne.s32.totalorder %s71, %s73
      %p80 = scmp.eq.s32.totalorder %s21, 1
      %p81 = por %p79, %p80
      %p82 = scmp.ne.s32.totalorder %s73, %s74
      %p83 = scmp.eq.s32.totalorder %s21, 0
      %p84 = por %p82, %p83
      %p85 = scmp.ne.s32.totalorder %s73, %s74
      %p86 = scmp.eq.s32.totalorder %s22, 1
      %p87 = por %p85, %p86
      %p89 = scmp.ne.s32.totalorder %s74, %s88
      %p90 = scmp.eq.s32.totalorder %s22, 0
      %p91 = por %p89, %p90
      %s93 = sadd.s32 %s92, 1
      %p96 = scmp.eq.s32.totalorder %s16, 1
      %p97 = scmp.ne.s32.totalorder %s92, %s94
      %p98 = scmp.eq.s32.totalorder %s16, 0
      %p99 = por %p97, %p98
      %p100 = scmp.ne.s32.totalorder %s92, %s94
      %p101 = scmp.eq.s32.totalorder %s21, 1
      %p102 = por %p100, %p101
      %p103 = scmp.ne.s32.totalorder %s94, %s95
      %p104 = scmp.eq.s32.totalorder %s21, 0
      %p105 = por %p103, %p104
      %p106 = scmp.ne.s32.totalorder %s94, %s95
      %p107 = scmp.eq.s32.totalorder %s22, 1
      %p108 = por %p106, %p107
      %p110 = scmp.ne.s32.totalorder %s95, %s109
      %p111 = scmp.eq.s32.totalorder %s22, 0
      %p112 = por %p110, %p111
      %s114 = sadd.s32 %s113, 1
      %p117 = scmp.eq.s32.totalorder %s16, 1
      %p118 = scmp.ne.s32.totalorder %s113, %s115
      %p119 = scmp.eq.s32.totalorder %s16, 0
      %p120 = por %p118, %p119
      %p121 = scmp.ne.s32.totalorder %s113, %s115
      %p122 = scmp.eq.s32.totalorder %s21, 1
      %p123 = por %p121, %p122
      %p124 = scmp.ne.s32.totalorder %s115, %s116
      %p125 = scmp.eq.s32.totalorder %s21, 0
      %p126 = por %p124, %p125
      %p127 = scmp.ne.s32.totalorder %s115, %s116
      %p128 = scmp.eq.s32.totalorder %s22, 1
      %p129 = por %p127, %p128
      %p131 = scmp.ne.s32.totalorder %s116, %s130
      %p132 = scmp.eq.s32.totalorder %s22, 0
      %p133 = por %p131, %p132
      %s134 = ssub.s32 %s16, %s23
      %p135 = scmp.eq.s32.totalorder %s134, 0
      %s137 = sadd.s32 %s136, 1
      %s138 = scalar_select %p135, %s136, %s137
      %p141 = pneg %p135
      %p142 = scmp.eq.s32.totalorder %s16, 1
      %p143 = por %p141, %p142
      %p144 = scmp.ne.s32.totalorder %s136, %s139
      %p145 = scmp.eq.s32.totalorder %s16, 0
      %p146 = por %p144, %p145
      %p147 = scmp.ne.s32.totalorder %s136, %s139
      %p148 = scmp.eq.s32.totalorder %s21, 1
      %p149 = por %p147, %p148
      %p150 = scmp.ne.s32.totalorder %s139, %s140
      %p151 = scmp.eq.s32.totalorder %s21, 0
      %p152 = por %p150, %p151
      %p153 = scmp.ne.s32.totalorder %s139, %s140
      %p154 = scmp.eq.s32.totalorder %s22, 1
      %p155 = por %p153, %p154
      %p157 = scmp.ne.s32.totalorder %s140, %s156
      %p158 = scmp.eq.s32.totalorder %s22, 0
      %p159 = por %p157, %p158
      %p160 = scmp.le.s32.totalorder 1, %s16
      %p161 = scmp.lt.s32.totalorder %s16, 3
      %p162 = pnand %p160, %p161
      %p163 = pneg %p162
      // Predicated region
      $region9: #{mlp_forward.1} parent=5 // pred_check
        _
      $region10: #{mlp_forward.1} parent=5 // pred_check_branch
        %165 = sbr.rel (%p162) target = $region12
      $region11: #{mlp_forward.1} parent=5 // pred_region
        %s166 = ssub.s32 %s16, 1
        // Predicated region
        $region13: #{mlp_forward.1} parent=11 // pred_check
          %p167 = pneg %p63
        $region14: #{mlp_forward.1} parent=11 // pred_check_branch
          %169 = sbr.rel (%p167) target = $region16
        $region15: #{mlp_forward.1} parent=11 // pred_region
          %171 = vsyncadd [#allocation5], 0
          %s172 = sshll.u32 %s1, 4
          %s173 = int_to_ptr.hbm [resolvable:$true] %s172
          %s174 = sshll.u32 [#allocation4], 4
          %s175 = int_to_ptr.vmem [resolvable:$true] %s174
          %180 = dma.hbm_to_vmem [thread:$0]  %s173, 12544, %s175, [#allocation5], 128, 128, 8
        $region16: #{mlp_forward.1} parent=11 // pred_fallthru
          _
        // Predicated region
        $region17: #{mlp_forward.1} parent=11 // pred_check
          %p181 = pneg %p84
        $region18: #{mlp_forward.1} parent=11 // pred_check_branch
          %183 = sbr.rel (%p181) target = $region20
        $region19: #{mlp_forward.1} parent=11 // pred_region
          %185 = vsyncadd [#allocation5], 0
          %s187 = sshll.u32 %s2, 4
          %s188 = int_to_ptr.hbm [resolvable:$true] %s187
          %s189 = sshll.u32 [#allocation6], 4
          %s190 = int_to_ptr.vmem [resolvable:$true] %s189
          %192 = dma.hbm_to_vmem [thread:$0]  %s188, 32, %s190, [#allocation5]
        $region20: #{mlp_forward.1} parent=11 // pred_fallthru
          _
        // Predicated region
        $region21: #{mlp_forward.1} parent=11 // pred_check
          %p193 = pneg %p105
        $region22: #{mlp_forward.1} parent=11 // pred_check_branch
          %195 = sbr.rel (%p193) target = $region24
        $region23: #{mlp_forward.1} parent=11 // pred_region
          %197 = vsyncadd [#allocation8], 0
          %s198 = sshll.u32 %s3, 4
          %s199 = int_to_ptr.hbm [resolvable:$true] %s198
          %s200 = sshll.u32 [#allocation7], 4
          %s201 = int_to_ptr.vmem [resolvable:$true] %s200
          %206 = dma.hbm_to_vmem [thread:$0]  %s199, 2048, %s201, [#allocation8], 64, 64, 4
        $region24: #{mlp_forward.1} parent=11 // pred_fallthru
          _
        // Predicated region
        $region25: #{mlp_forward.1} parent=11 // pred_check
          %p207 = pneg %p126
        $region26: #{mlp_forward.1} parent=11 // pred_check_branch
          %209 = sbr.rel (%p207) target = $region28
        $region27: #{mlp_forward.1} parent=11 // pred_region
          _
        $region28: #{mlp_forward.1} parent=11 // pred_fallthru
          _
      $region12: #{mlp_forward.1} parent=5 // pred_fallthru
        _
      %p210 = scmp.lt.s32.totalorder %s16, 2
      // Predicated region
      $region29: #{mlp_forward.1} parent=5 // pred_check
        %p211 = pneg %p210
      $region30: #{mlp_forward.1} parent=5 // pred_check_branch
        %213 = sbr.rel (%p211) target = $region32
      $region31: #{mlp_forward.1} parent=5 // pred_region
        // Predicated region
        $region33: #{mlp_forward.1} parent=31 // pred_check
          %p214 = pneg %p36
        $region34: #{mlp_forward.1} parent=31 // pred_check_branch
          %216 = sbr.rel (%p214) target = $region36
        $region35: #{mlp_forward.1} parent=31 // pred_region
          %s217 = sand.u32 %s26, 1
          %s218 = scalar_lea.sflag [#allocation3], %s217
          %s219 = sand.u32 %s26, 1
          %s220 = smul.addr %s219, 112
          %s221 = scalar_lea.vmem [#allocation2], %s220
          %s222 = smul.u32 2, %s16
          %224 = vsyncadd %s218, 0
          %s225 = smul.addr %s222, 7
          %s226 = smul.addr %s225, 8
          %s227 = scalar_lea.hbm %s0, %s226
          %s228 = sshll.u32 %s227, 4
          %s229 = int_to_ptr.hbm [resolvable:$true] %s228
          %s230 = sshll.u32 %s221, 4
          %s231 = int_to_ptr.vmem [resolvable:$true] %s230
          %236 = dma.hbm_to_vmem [thread:$0]  %s229, 1792, %s231, %s218, 896, 896, 56
        $region36: #{mlp_forward.1} parent=31 // pred_fallthru
          _
      $region32: #{mlp_forward.1} parent=5 // pred_fallthru
        _
      %p237 = scmp.le.s32.totalorder 1, %s16
      %p238 = scmp.lt.s32.totalorder %s16, 3
      %p239 = pnand %p237, %p238
      %p240 = pneg %p239
      // Predicated region
      $region37: #{mlp_forward.1} parent=5 // pred_check
        _
      $region38: #{mlp_forward.1} parent=5 // pred_check_branch
        %242 = sbr.rel (%p239) target = $region40
      $region39: #{mlp_forward.1} parent=5 // pred_region
        %s243 = ssub.s32 %s16, 1
        %s244 = sand.u32 %s29, 1
        %s245 = scalar_lea.sflag [#allocation3], %s244
        %s246 = sand.u32 %s29, 1
        %s247 = smul.addr %s246, 112
        %s248 = scalar_lea.vmem [#allocation2], %s247
        // Predicated region
        $region41: #{mlp_forward.1} parent=39 // pred_check
          %p249 = pneg %p42
        $region42: #{mlp_forward.1} parent=39 // pred_check_branch
          %251 = sbr.rel (%p249) target = $region44
        $region43: #{mlp_forward.1} parent=39 // pred_region
          %253 = dma.done %s245, 1792
        $region44: #{mlp_forward.1} parent=39 // pred_fallthru
          _
        // Predicated region
        $region45: #{mlp_forward.1} parent=39 // pred_check
          %p254 = pneg %p63
        $region46: #{mlp_forward.1} parent=39 // pred_check_branch
          %256 = sbr.rel (%p254) target = $region48
        $region47: #{mlp_forward.1} parent=39 // pred_region
          %258 = dma.done [#allocation5], 12544
        $region48: #{mlp_forward.1} parent=39 // pred_fallthru
          _
        // Predicated region
        $region49: #{mlp_forward.1} parent=39 // pred_check
          %p259 = pneg %p84
        $region50: #{mlp_forward.1} parent=39 // pred_check_branch
          %261 = sbr.rel (%p259) target = $region52
        $region51: #{mlp_forward.1} parent=39 // pred_region
          %263 = dma.done [#allocation5], 32
        $region52: #{mlp_forward.1} parent=39 // pred_fallthru
          _
        // Predicated region
        $region53: #{mlp_forward.1} parent=39 // pred_check
          %p264 = pneg %p105
        $region54: #{mlp_forward.1} parent=39 // pred_check_branch
          %266 = sbr.rel (%p264) target = $region56
        $region55: #{mlp_forward.1} parent=39 // pred_region
          %268 = dma.done [#allocation8], 2048
        $region56: #{mlp_forward.1} parent=39 // pred_fallthru
          _
        %s269 = sand.u32 %s29, 1
        %s270 = scalar_lea.sflag [#allocation3], %s269
        %s271 = sand.u32 %s29, 1
        %s272 = smul.addr %s271, 112
        %s273 = scalar_lea.vmem [#allocation2], %s272
        %p274 = pneg %p42
        %p275 = pneg %p39
        %p276 = pneg %p63
        %p277 = pneg %p60
        %p278 = pneg %p84
        %p279 = pneg %p81
        %p280 = pneg %p105
        %p281 = pneg %p102
        %p282 = pneg %p126
        %p283 = pneg %p123
        %p284 = pneg %p152
        %p285 = pneg %p149
        %s286 = smul.u32 2, %s21
        %p287 = scmp.lt.s32.totalorder %s286, 3
        %s288 = scalar_select %p287, %s286, 3
        %s289 = smul.addr %s288, 8
        %s290 = scalar_lea.vmem %s5, %s289
        %s291 = smul.u32 2, %s21
        %s292 = smul.u32 2, %s21
        %p293 = scmp.lt.s32.totalorder %s292, 3
        %s294 = scalar_select %p293, %s292, 3
        %s295 = smul.addr %s294, 8
        %s296 = scalar_lea.vmem %s5, %s295
        %s297 = smul.u32 2, %s21
        %v299 = vld [vmem:[%s248] sm:$0xff]
        %v300 = vld [vmem:[%s248 + $0x8] sm:$0xff]
        %v301 = vld [vmem:[%s248 + $0x10] sm:$0xff]
        %v302 = vld [vmem:[%s248 + $0x18] sm:$0xff]
        %v303 = vld [vmem:[%s248 + $0x20] sm:$0xff]
        %v304 = vld [vmem:[%s248 + $0x28] sm:$0xff]
        %v305 = vld [vmem:[%s248 + $0x30] sm:$0xff]
        %v306 = vld [vmem:[%s248 + $0x38] sm:$0xff]
        %v307 = vld [vmem:[%s248 + $0x40] sm:$0xff]
        %v308 = vld [vmem:[%s248 + $0x48] sm:$0xff]
        %v309 = vld [vmem:[%s248 + $0x50] sm:$0xff]
        %v310 = vld [vmem:[%s248 + $0x58] sm:$0xff]
        %v311 = vld [vmem:[%s248 + $0x60] sm:$0xff]
        %v312 = vld [vmem:[%s248 + $0x68] sm:$0xff]
        %v313 = vpack.c.bf16 %v306, %v299
        %v314 = vpack.c.bf16 %v307, %v300
        %v315 = vpack.c.bf16 %v308, %v301
        %v316 = vpack.c.bf16 %v309, %v302
        %v317 = vpack.c.bf16 %v310, %v303
        %v318 = vpack.c.bf16 %v311, %v304
        %v319 = vpack.c.bf16 %v312, %v305
        %v320 = vld [vmem:[#allocation4] sm:$0xff]
        %v321 = vld [vmem:[#allocation4 + $0x8] sm:$0xff]
        %v322 = vld [vmem:[#allocation4 + $0x10] sm:$0xff]
        %v323 = vld [vmem:[#allocation4 + $0x18] sm:$0xff]
        %v324 = vld [vmem:[#allocation4 + $0x20] sm:$0xff]
        %v325 = vld [vmem:[#allocation4 + $0x28] sm:$0xff]
        %v326 = vld [vmem:[#allocation4 + $0x30] sm:$0xff]
        %v327 = vld [vmem:[#allocation4 + $0x38] sm:$0xff]
        %v328 = vld [vmem:[#allocation4 + $0x40] sm:$0xff]
        %v329 = vld [vmem:[#allocation4 + $0x48] sm:$0xff]
        %v330 = vld [vmem:[#allocation4 + $0x50] sm:$0xff]
        %v331 = vld [vmem:[#allocation4 + $0x58] sm:$0xff]
        %v332 = vld [vmem:[#allocation4 + $0x60] sm:$0xff]
        %v333 = vld [vmem:[#allocation4 + $0x68] sm:$0xff]
        %v334 = vld [vmem:[#allocation4 + $0x70] sm:$0xff]
        %v335 = vld [vmem:[#allocation4 + $0x78] sm:$0xff]
        %v336 = vld [vmem:[#allocation4 + $0x80] sm:$0xff]
        %v337 = vld [vmem:[#allocation4 + $0x88] sm:$0xff]
        %v338 = vld [vmem:[#allocation4 + $0x90] sm:$0xff]
        %v339 = vld [vmem:[#allocation4 + $0x98] sm:$0xff]
        %v340 = vld [vmem:[#allocation4 + $0xa0] sm:$0xff]
        %v341 = vld [vmem:[#allocation4 + $0xa8] sm:$0xff]
        %v342 = vld [vmem:[#allocation4 + $0xb0] sm:$0xff]
        %v343 = vld [vmem:[#allocation4 + $0xb8] sm:$0xff]
        %v344 = vld [vmem:[#allocation4 + $0xc0] sm:$0xff]
        %v345 = vld [vmem:[#allocation4 + $0xc8] sm:$0xff]
        %v346 = vld [vmem:[#allocation4 + $0xd0] sm:$0xff]
        %v347 = vld [vmem:[#allocation4 + $0xd8] sm:$0xff]
        %v348 = vld [vmem:[#allocation4 + $0xe0] sm:$0xff]
        %v349 = vld [vmem:[#allocation4 + $0xe8] sm:$0xff]
        %v350 = vld [vmem:[#allocation4 + $0xf0] sm:$0xff]
        %v351 = vld [vmem:[#allocation4 + $0xf8] sm:$0xff]
        %v352 = vld [vmem:[#allocation4 + $0x100] sm:$0xff]
        %v353 = vld [vmem:[#allocation4 + $0x108] sm:$0xff]
        %v354 = vld [vmem:[#allocation4 + $0x110] sm:$0xff]
        %v355 = vld [vmem:[#allocation4 + $0x118] sm:$0xff]
        %v356 = vld [vmem:[#allocation4 + $0x120] sm:$0xff]
        %v357 = vld [vmem:[#allocation4 + $0x128] sm:$0xff]
        %v358 = vld [vmem:[#allocation4 + $0x130] sm:$0xff]
        %v359 = vld [vmem:[#allocation4 + $0x138] sm:$0xff]
        %v360 = vld [vmem:[#allocation4 + $0x140] sm:$0xff]
        %v361 = vld [vmem:[#allocation4 + $0x148] sm:$0xff]
        %v362 = vld [vmem:[#allocation4 + $0x150] sm:$0xff]
        %v363 = vld [vmem:[#allocation4 + $0x158] sm:$0xff]
        %v364 = vld [vmem:[#allocation4 + $0x160] sm:$0xff]
        %v365 = vld [vmem:[#allocation4 + $0x168] sm:$0xff]
        %v366 = vld [vmem:[#allocation4 + $0x170] sm:$0xff]
        %v367 = vld [vmem:[#allocation4 + $0x178] sm:$0xff]
        %v368 = vld [vmem:[#allocation4 + $0x180] sm:$0xff]
        %v369 = vld [vmem:[#allocation4 + $0x188] sm:$0xff]
        %v370 = vld [vmem:[#allocation4 + $0x190] sm:$0xff]
        %v371 = vld [vmem:[#allocation4 + $0x198] sm:$0xff]
        %v372 = vld [vmem:[#allocation4 + $0x1a0] sm:$0xff]
        %v373 = vld [vmem:[#allocation4 + $0x1a8] sm:$0xff]
        %v374 = vld [vmem:[#allocation4 + $0x1b0] sm:$0xff]
        %v375 = vld [vmem:[#allocation4 + $0x1b8] sm:$0xff]
        %v376 = vld [vmem:[#allocation4 + $0x1c0] sm:$0xff]
        %v377 = vld [vmem:[#allocation4 + $0x1c8] sm:$0xff]
        %v378 = vld [vmem:[#allocation4 + $0x1d0] sm:$0xff]
        %v379 = vld [vmem:[#allocation4 + $0x1d8] sm:$0xff]
        %v380 = vld [vmem:[#allocation4 + $0x1e0] sm:$0xff]
        %v381 = vld [vmem:[#allocation4 + $0x1e8] sm:$0xff]
        %v382 = vld [vmem:[#allocation4 + $0x1f0] sm:$0xff]
        %v383 = vld [vmem:[#allocation4 + $0x1f8] sm:$0xff]
        %v384 = vld [vmem:[#allocation4 + $0x200] sm:$0xff]
        %v385 = vld [vmem:[#allocation4 + $0x208] sm:$0xff]
        %v386 = vld [vmem:[#allocation4 + $0x210] sm:$0xff]
        %v387 = vld [vmem:[#allocation4 + $0x218] sm:$0xff]
        %v388 = vld [vmem:[#allocation4 + $0x220] sm:$0xff]
        %v389 = vld [vmem:[#allocation4 + $0x228] sm:$0xff]
        %v390 = vld [vmem:[#allocation4 + $0x230] sm:$0xff]
        %v391 = vld [vmem:[#allocation4 + $0x238] sm:$0xff]
        %v392 = vld [vmem:[#allocation4 + $0x240] sm:$0xff]
        %v393 = vld [vmem:[#allocation4 + $0x248] sm:$0xff]
        %v394 = vld [vmem:[#allocation4 + $0x250] sm:$0xff]
        %v395 = vld [vmem:[#allocation4 + $0x258] sm:$0xff]
        %v396 = vld [vmem:[#allocation4 + $0x260] sm:$0xff]
        %v397 = vld [vmem:[#allocation4 + $0x268] sm:$0xff]
        %v398 = vld [vmem:[#allocation4 + $0x270] sm:$0xff]
        %v399 = vld [vmem:[#allocation4 + $0x278] sm:$0xff]
        %v400 = vld [vmem:[#allocation4 + $0x280] sm:$0xff]
        %v401 = vld [vmem:[#allocation4 + $0x288] sm:$0xff]
        %v402 = vld [vmem:[#allocation4 + $0x290] sm:$0xff]
        %v403 = vld [vmem:[#allocation4 + $0x298] sm:$0xff]
        %v404 = vld [vmem:[#allocation4 + $0x2a0] sm:$0xff]
        %v405 = vld [vmem:[#allocation4 + $0x2a8] sm:$0xff]
        %v406 = vld [vmem:[#allocation4 + $0x2b0] sm:$0xff]
        %v407 = vld [vmem:[#allocation4 + $0x2b8] sm:$0xff]
        %v408 = vld [vmem:[#allocation4 + $0x2c0] sm:$0xff]
        %v409 = vld [vmem:[#allocation4 + $0x2c8] sm:$0xff]
        %v410 = vld [vmem:[#allocation4 + $0x2d0] sm:$0xff]
        %v411 = vld [vmem:[#allocation4 + $0x2d8] sm:$0xff]
        %v412 = vld [vmem:[#allocation4 + $0x2e0] sm:$0xff]
        %v413 = vld [vmem:[#allocation4 + $0x2e8] sm:$0xff]
        %v414 = vld [vmem:[#allocation4 + $0x2f0] sm:$0xff]
        %v415 = vld [vmem:[#allocation4 + $0x2f8] sm:$0xff]
        %v416 = vld [vmem:[#allocation4 + $0x300] sm:$0xff]
        %v417 = vld [vmem:[#allocation4 + $0x308] sm:$0xff]
        %v418 = vld [vmem:[#allocation6] sm:$0x3]
        %v420 = vperm.slane %v418, 0
        %v421 = vperm.slane %v418, 1
        %v522 = vunpack.c.l.b16 %v320
        %v523 = vunpack.c.h.b16 %v320
        %v524 = vunpack.c.l.b16 %v321
        %v525 = vunpack.c.h.b16 %v321
        %v526 = vunpack.c.l.b16 %v322
        %v527 = vunpack.c.h.b16 %v322
        %v528 = vunpack.c.l.b16 %v323
        %v529 = vunpack.c.h.b16 %v323
        %v530 = vunpack.c.l.b16 %v324
        %v531 = vunpack.c.h.b16 %v324
        %v532 = vunpack.c.l.b16 %v325
        %v533 = vunpack.c.h.b16 %v325
        %v534 = vunpack.c.l.b16 %v326
        %v535 = vunpack.c.h.b16 %v326
        %v536 = vunpack.c.l.b16 %v327
        %v537 = vunpack.c.h.b16 %v327
        %v538 = vunpack.c.l.b16 %v328
        %v539 = vunpack.c.h.b16 %v328
        %v540 = vunpack.c.l.b16 %v329
        %v541 = vunpack.c.h.b16 %v329
        %v542 = vunpack.c.l.b16 %v330
        %v543 = vunpack.c.h.b16 %v330
        %v544 = vunpack.c.l.b16 %v331
        %v545 = vunpack.c.h.b16 %v331
        %v546 = vunpack.c.l.b16 %v332
        %v547 = vunpack.c.h.b16 %v332
        %v548 = vunpack.c.l.b16 %v333
        %v549 = vunpack.c.h.b16 %v333
        %v550 = vunpack.c.l.b16 %v334
        %v551 = vunpack.c.h.b16 %v334
        %v552 = vunpack.c.l.b16 %v335
        %v553 = vunpack.c.h.b16 %v335
        %v554 = vunpack.c.l.b16 %v336
        %v555 = vunpack.c.h.b16 %v336
        %v556 = vunpack.c.l.b16 %v337
        %v557 = vunpack.c.h.b16 %v337
        %v558 = vunpack.c.l.b16 %v338
        %v559 = vunpack.c.h.b16 %v338
        %v560 = vunpack.c.l.b16 %v339
        %v561 = vunpack.c.h.b16 %v339
        %v562 = vunpack.c.l.b16 %v340
        %v563 = vunpack.c.h.b16 %v340
        %v564 = vunpack.c.l.b16 %v341
        %v565 = vunpack.c.h.b16 %v341
        %v566 = vunpack.c.l.b16 %v342
        %v567 = vunpack.c.h.b16 %v342
        %v568 = vunpack.c.l.b16 %v343
        %v569 = vunpack.c.h.b16 %v343
        %v570 = vunpack.c.l.b16 %v344
        %v571 = vunpack.c.h.b16 %v344
        %v572 = vunpack.c.l.b16 %v345
        %v573 = vunpack.c.h.b16 %v345
        %v574 = vunpack.c.l.b16 %v346
        %v575 = vunpack.c.h.b16 %v346
        %v576 = vunpack.c.l.b16 %v347
        %v577 = vunpack.c.h.b16 %v347
        %v578 = vunpack.c.l.b16 %v348
        %v579 = vunpack.c.h.b16 %v348
        %v580 = vunpack.c.l.b16 %v349
        %v581 = vunpack.c.h.b16 %v349
        %v582 = vunpack.c.l.b16 %v350
        %v583 = vunpack.c.h.b16 %v350
        %v584 = vunpack.c.l.b16 %v351
        %v585 = vunpack.c.h.b16 %v351
        %v586 = vunpack.c.l.b16 %v352
        %v587 = vunpack.c.h.b16 %v352
        %v588 = vunpack.c.l.b16 %v353
        %v589 = vunpack.c.h.b16 %v353
        %v590 = vunpack.c.l.b16 %v354
        %v591 = vunpack.c.h.b16 %v354
        %v592 = vunpack.c.l.b16 %v355
        %v593 = vunpack.c.h.b16 %v355
        %v594 = vunpack.c.l.b16 %v356
        %v595 = vunpack.c.h.b16 %v356
        %v596 = vunpack.c.l.b16 %v357
        %v597 = vunpack.c.h.b16 %v357
        %v598 = vunpack.c.l.b16 %v358
        %v599 = vunpack.c.h.b16 %v358
        %v600 = vunpack.c.l.b16 %v359
        %v601 = vunpack.c.h.b16 %v359
        %v602 = vunpack.c.l.b16 %v360
        %v603 = vunpack.c.h.b16 %v360
        %v604 = vunpack.c.l.b16 %v361
        %v605 = vunpack.c.h.b16 %v361
        %v606 = vunpack.c.l.b16 %v362
        %v607 = vunpack.c.h.b16 %v362
        %v608 = vunpack.c.l.b16 %v363
        %v609 = vunpack.c.h.b16 %v363
        %v610 = vunpack.c.l.b16 %v364
        %v611 = vunpack.c.h.b16 %v364
        %v612 = vunpack.c.l.b16 %v365
        %v613 = vunpack.c.h.b16 %v365
        %v614 = vunpack.c.l.b16 %v366
        %v615 = vunpack.c.h.b16 %v366
        %v616 = vunpack.c.l.b16 %v367
        %v617 = vunpack.c.h.b16 %v367
        %v618 = vunpack.c.l.b16 %v368
        %v619 = vunpack.c.h.b16 %v368
        %v620 = vunpack.c.l.b16 %v369
        %v621 = vunpack.c.h.b16 %v369
        %v622 = vunpack.c.l.b16 %v370
        %v623 = vunpack.c.h.b16 %v370
        %v624 = vunpack.c.l.b16 %v371
        %v625 = vunpack.c.h.b16 %v371
        %v626 = vunpack.c.l.b16 %v372
        %v627 = vunpack.c.h.b16 %v372
        %v628 = vunpack.c.l.b16 %v373
        %v629 = vunpack.c.h.b16 %v373
        %v630 = vunpack.c.l.b16 %v374
        %v631 = vunpack.c.h.b16 %v374
        %v632 = vunpack.c.l.b16 %v375
        %v633 = vunpack.c.h.b16 %v375
        %v634 = vunpack.c.l.b16 %v376
        %v635 = vunpack.c.h.b16 %v376
        %v636 = vunpack.c.l.b16 %v377
        %v637 = vunpack.c.h.b16 %v377
        %v638 = vunpack.c.l.b16 %v378
        %v639 = vunpack.c.h.b16 %v378
        %v640 = vunpack.c.l.b16 %v379
        %v641 = vunpack.c.h.b16 %v379
        %v642 = vunpack.c.l.b16 %v380
        %v643 = vunpack.c.h.b16 %v380
        %v644 = vunpack.c.l.b16 %v381
        %v645 = vunpack.c.h.b16 %v381
        %v646 = vunpack.c.l.b16 %v382
        %v647 = vunpack.c.h.b16 %v382
        %v648 = vunpack.c.l.b16 %v383
        %v649 = vunpack.c.h.b16 %v383
        %v650 = vunpack.c.l.b16 %v384
        %v651 = vunpack.c.h.b16 %v384
        %v652 = vunpack.c.l.b16 %v385
        %v653 = vunpack.c.h.b16 %v385
        %v654 = vunpack.c.l.b16 %v386
        %v655 = vunpack.c.h.b16 %v386
        %v656 = vunpack.c.l.b16 %v387
        %v657 = vunpack.c.h.b16 %v387
        %v658 = vunpack.c.l.b16 %v388
        %v659 = vunpack.c.h.b16 %v388
        %v660 = vunpack.c.l.b16 %v389
        %v661 = vunpack.c.h.b16 %v389
        %v662 = vunpack.c.l.b16 %v390
        %v663 = vunpack.c.h.b16 %v390
        %v664 = vunpack.c.l.b16 %v391
        %v665 = vunpack.c.h.b16 %v391
        %v666 = vunpack.c.l.b16 %v392
        %v667 = vunpack.c.h.b16 %v392
        %v668 = vunpack.c.l.b16 %v393
        %v669 = vunpack.c.h.b16 %v393
        %v670 = vunpack.c.l.b16 %v394
        %v671 = vunpack.c.h.b16 %v394
        %v672 = vunpack.c.l.b16 %v395
        %v673 = vunpack.c.h.b16 %v395
        %v674 = vunpack.c.l.b16 %v396
        %v675 = vunpack.c.h.b16 %v396
        %v676 = vunpack.c.l.b16 %v397
        %v677 = vunpack.c.h.b16 %v397
        %v678 = vunpack.c.l.b16 %v398
        %v679 = vunpack.c.h.b16 %v398
        %v680 = vunpack.c.l.b16 %v399
        %v681 = vunpack.c.h.b16 %v399
        %v682 = vunpack.c.l.b16 %v400
        %v683 = vunpack.c.h.b16 %v400
        %v684 = vunpack.c.l.b16 %v401
        %v685 = vunpack.c.h.b16 %v401
        %v686 = vunpack.c.l.b16 %v402
        %v687 = vunpack.c.h.b16 %v402
        %v688 = vunpack.c.l.b16 %v403
        %v689 = vunpack.c.h.b16 %v403
        %v690 = vunpack.c.l.b16 %v404
        %v691 = vunpack.c.h.b16 %v404
        %v692 = vunpack.c.l.b16 %v405
        %v693 = vunpack.c.h.b16 %v405
        %v694 = vunpack.c.l.b16 %v406
        %v695 = vunpack.c.h.b16 %v406
        %v696 = vunpack.c.l.b16 %v407
        %v697 = vunpack.c.h.b16 %v407
        %v698 = vunpack.c.l.b16 %v408
        %v699 = vunpack.c.h.b16 %v408
        %v700 = vunpack.c.l.b16 %v409
        %v701 = vunpack.c.h.b16 %v409
        %v702 = vunpack.c.l.b16 %v410
        %v703 = vunpack.c.h.b16 %v410
        %v704 = vunpack.c.l.b16 %v411
        %v705 = vunpack.c.h.b16 %v411
        %v706 = vunpack.c.l.b16 %v412
        %v707 = vunpack.c.h.b16 %v412
        %v708 = vunpack.c.l.b16 %v413
        %v709 = vunpack.c.h.b16 %v413
        %v710 = vunpack.c.l.b16 %v414
        %v711 = vunpack.c.h.b16 %v414
        %v712 = vunpack.c.l.b16 %v415
        %v713 = vunpack.c.h.b16 %v415
        %v714 = vunpack.c.l.b16 %v416
        %v715 = vunpack.c.h.b16 %v416
        %v716 = vunpack.c.l.b16 %v417
        %v717 = vunpack.c.h.b16 %v417
        %v718 = vpack.c.b16 %v524, %v522
        %v719 = vpack.c.b16 %v525, %v523
        %v720 = vpack.c.b16 %v528, %v526
        %v721 = vpack.c.b16 %v529, %v527
        %v722 = vpack.c.b16 %v532, %v530
        %v723 = vpack.c.b16 %v533, %v531
        %v724 = vpack.c.b16 %v536, %v534
        %v725 = vpack.c.b16 %v537, %v535
        %v726 = vpack.c.b16 %v540, %v538
        %v727 = vpack.c.b16 %v541, %v539
        %v728 = vpack.c.b16 %v544, %v542
        %v729 = vpack.c.b16 %v545, %v543
        %v730 = vpack.c.b16 %v548, %v546
        %v731 = vpack.c.b16 %v549, %v547
        %v732 = vpack.c.b16 %v552, %v550
        %v733 = vpack.c.b16 %v553, %v551
        %v734 = vpack.c.b16 %v556, %v554
        %v735 = vpack.c.b16 %v557, %v555
        %v736 = vpack.c.b16 %v560, %v558
        %v737 = vpack.c.b16 %v561, %v559
        %v738 = vpack.c.b16 %v564, %v562
        %v739 = vpack.c.b16 %v565, %v563
        %v740 = vpack.c.b16 %v568, %v566
        %v741 = vpack.c.b16 %v569, %v567
        %v742 = vpack.c.b16 %v572, %v570
        %v743 = vpack.c.b16 %v573, %v571
        %v744 = vpack.c.b16 %v576, %v574
        %v745 = vpack.c.b16 %v577, %v575
        %v746 = vpack.c.b16 %v580, %v578
        %v747 = vpack.c.b16 %v581, %v579
        %v748 = vpack.c.b16 %v584, %v582
        %v749 = vpack.c.b16 %v585, %v583
        %v750 = vpack.c.b16 %v588, %v586
        %v751 = vpack.c.b16 %v589, %v587
        %v752 = vpack.c.b16 %v592, %v590
        %v753 = vpack.c.b16 %v593, %v591
        %v754 = vpack.c.b16 %v596, %v594
        %v755 = vpack.c.b16 %v597, %v595
        %v756 = vpack.c.b16 %v600, %v598
        %v757 = vpack.c.b16 %v601, %v599
        %v758 = vpack.c.b16 %v604, %v602
        %v759 = vpack.c.b16 %v605, %v603
        %v760 = vpack.c.b16 %v608, %v606
        %v761 = vpack.c.b16 %v609, %v607
        %v762 = vpack.c.b16 %v612, %v610
        %v763 = vpack.c.b16 %v613, %v611
        %v764 = vpack.c.b16 %v616, %v614
        %v765 = vpack.c.b16 %v617, %v615
        %v766 = vpack.c.b16 %v620, %v618
        %v767 = vpack.c.b16 %v621, %v619
        %v768 = vpack.c.b16 %v624, %v622
        %v769 = vpack.c.b16 %v625, %v623
        %v770 = vpack.c.b16 %v628, %v626
        %v771 = vpack.c.b16 %v629, %v627
        %v772 = vpack.c.b16 %v632, %v630
        %v773 = vpack.c.b16 %v633, %v631
        %v774 = vpack.c.b16 %v636, %v634
        %v775 = vpack.c.b16 %v637, %v635
        %v776 = vpack.c.b16 %v640, %v638
        %v777 = vpack.c.b16 %v641, %v639
        %v778 = vpack.c.b16 %v644, %v642
        %v779 = vpack.c.b16 %v645, %v643
        %v780 = vpack.c.b16 %v648, %v646
        %v781 = vpack.c.b16 %v649, %v647
        %v782 = vpack.c.b16 %v652, %v650
        %v783 = vpack.c.b16 %v653, %v651
        %v784 = vpack.c.b16 %v656, %v654
        %v785 = vpack.c.b16 %v657, %v655
        %v786 = vpack.c.b16 %v660, %v658
        %v787 = vpack.c.b16 %v661, %v659
        %v788 = vpack.c.b16 %v664, %v662
        %v789 = vpack.c.b16 %v665, %v663
        %v790 = vpack.c.b16 %v668, %v666
        %v791 = vpack.c.b16 %v669, %v667
        %v792 = vpack.c.b16 %v672, %v670
        %v793 = vpack.c.b16 %v673, %v671
        %v794 = vpack.c.b16 %v676, %v674
        %v795 = vpack.c.b16 %v677, %v675
        %v796 = vpack.c.b16 %v680, %v678
        %v797 = vpack.c.b16 %v681, %v679
        %v798 = vpack.c.b16 %v684, %v682
        %v799 = vpack.c.b16 %v685, %v683
        %v800 = vpack.c.b16 %v688, %v686
        %v801 = vpack.c.b16 %v689, %v687
        %v802 = vpack.c.b16 %v692, %v690
        %v803 = vpack.c.b16 %v693, %v691
        %v804 = vpack.c.b16 %v696, %v694
        %v805 = vpack.c.b16 %v697, %v695
        %v806 = vpack.c.b16 %v700, %v698
        %v807 = vpack.c.b16 %v701, %v699
        %v808 = vpack.c.b16 %v704, %v702
        %v809 = vpack.c.b16 %v705, %v703
        %v810 = vpack.c.b16 %v708, %v706
        %v811 = vpack.c.b16 %v709, %v707
        %v812 = vpack.c.b16 %v712, %v710
        %v813 = vpack.c.b16 %v713, %v711
        %v814 = vpack.c.b16 %v716, %v714
        %v815 = vpack.c.b16 %v717, %v715
        %vm914 = vcmask 130048
        %v916 = vsel %vm914, %v319, 0
        %918 = vmatpush.bf16.msra.mxu0 %v732
        %919 = vmatpush.bf16.msra.mxu0 %v730
        %920 = vmatpush.bf16.msra.mxu0 %v728
        %921 = vmatpush.bf16.msra.mxu0 %v726
        %922 = vmatpush.bf16.msra.mxu0 %v724
        %923 = vmatpush.bf16.msra.mxu0 %v722
        %924 = vmatpush.bf16.msra.mxu0 %v720
        %925 = vmatpush.bf16.msra.mxu0 %v718
        %926 = vmatmul.bf16.gmra.mxu0 %v313
        %v927 = vpop.f32.mrf.mxu0
        %v928 = vadd.f32 %v420, %v927
        %v929 = vpop.f32.mrf.mxu0
        %v930 = vadd.f32 %v420, %v929
        %931 = vdwg.mxu0
        %932 = vmatpush.bf16.msra.mxu0 %v748
        %933 = vmatpush.bf16.msra.mxu0 %v746
        %934 = vmatpush.bf16.msra.mxu0 %v744
        %935 = vmatpush.bf16.msra.mxu0 %v742
        %936 = vmatpush.bf16.msra.mxu0 %v740
        %937 = vmatpush.bf16.msra.mxu0 %v738
        %938 = vmatpush.bf16.msra.mxu0 %v736
        %939 = vmatpush.bf16.msra.mxu0 %v734
        %940 = vmatmul.bf16.gmra.mxu0 %v314
        %v941 = vpop.f32.mrf.mxu0
        %v942 = vadd.f32 %v928, %v941
        %v943 = vpop.f32.mrf.mxu0
        %v944 = vadd.f32 %v930, %v943
        %945 = vdwg.mxu0
        %946 = vmatpush.bf16.msra.mxu0 %v764
        %947 = vmatpush.bf16.msra.mxu0 %v762
        %948 = vmatpush.bf16.msra.mxu0 %v760
        %949 = vmatpush.bf16.msra.mxu0 %v758
        %950 = vmatpush.bf16.msra.mxu0 %v756
        %951 = vmatpush.bf16.msra.mxu0 %v754
        %952 = vmatpush.bf16.msra.mxu0 %v752
        %953 = vmatpush.bf16.msra.mxu0 %v750
        %954 = vmatmul.bf16.gmra.mxu0 %v315
        %v955 = vpop.f32.mrf.mxu0
        %v956 = vadd.f32 %v942, %v955
        %v957 = vpop.f32.mrf.mxu0
        %v958 = vadd.f32 %v944, %v957
        %959 = vdwg.mxu0
        %960 = vmatpush.bf16.msra.mxu0 %v780
        %961 = vmatpush.bf16.msra.mxu0 %v778
        %962 = vmatpush.bf16.msra.mxu0 %v776
        %963 = vmatpush.bf16.msra.mxu0 %v774
        %964 = vmatpush.bf16.msra.mxu0 %v772
        %965 = vmatpush.bf16.msra.mxu0 %v770
        %966 = vmatpush.bf16.msra.mxu0 %v768
        %967 = vmatpush.bf16.msra.mxu0 %v766
        %968 = vmatmul.bf16.gmra.mxu0 %v316
        %v969 = vpop.f32.mrf.mxu0
        %v970 = vadd.f32 %v956, %v969
        %v971 = vpop.f32.mrf.mxu0
        %v972 = vadd.f32 %v958, %v971
        %973 = vdwg.mxu0
        %974 = vmatpush.bf16.msra.mxu0 %v796
        %975 = vmatpush.bf16.msra.mxu0 %v794
        %976 = vmatpush.bf16.msra.mxu0 %v792
        %977 = vmatpush.bf16.msra.mxu0 %v790
        %978 = vmatpush.bf16.msra.mxu0 %v788
        %979 = vmatpush.bf16.msra.mxu0 %v786
        %980 = vmatpush.bf16.msra.mxu0 %v784
        %981 = vmatpush.bf16.msra.mxu0 %v782
        %982 = vmatmul.bf16.gmra.mxu0 %v317
        %v983 = vpop.f32.mrf.mxu0
        %v984 = vadd.f32 %v970, %v983
        %v985 = vpop.f32.mrf.mxu0
        %v986 = vadd.f32 %v972, %v985
        %987 = vdwg.mxu0
        %988 = vmatpush.bf16.msra.mxu0 %v812
        %989 = vmatpush.bf16.msra.mxu0 %v810
        %990 = vmatpush.bf16.msra.mxu0 %v808
        %991 = vmatpush.bf16.msra.mxu0 %v806
        %992 = vmatpush.bf16.msra.mxu0 %v804
        %993 = vmatpush.bf16.msra.mxu0 %v802
        %994 = vmatpush.bf16.msra.mxu0 %v800
        %995 = vmatpush.bf16.msra.mxu0 %v798
        %996 = vmatmul.bf16.gmra.mxu0 %v318
        %v997 = vpop.f32.mrf.mxu0
        %v998 = vadd.f32 %v984, %v997
        %v999 = vpop.f32.mrf.mxu0
        %v1000 = vadd.f32 %v986, %v999
        %1001 = vdwg.mxu0
        %1002 = vmatpush.bf16.msra.mxu0 0
        %1003 = vmatpush.bf16.msra.mxu0 0
        %1004 = vmatpush.bf16.msra.mxu0 0
        %1005 = vmatpush.bf16.msra.mxu0 0
        %1006 = vmatpush.bf16.msra.mxu0 0
        %1007 = vmatpush.bf16.msra.mxu0 0
        %1008 = vmatpush.bf16.msra.mxu0 0
        %1009 = vmatpush.bf16.msra.mxu0 %v814
        %1010 = vmatmul.bf16.gmra.mxu0 %v916
        %v1011 = vpop.f32.mrf.mxu0
        %v1012 = vadd.f32 %v998, %v1011
        %v1013 = vpop.f32.mrf.mxu0
        %v1014 = vadd.f32 %v1000, %v1013
        %1015 = vdwg.mxu0
        %1016 = vmatpush.bf16.msra.mxu0 %v733
        %1017 = vmatpush.bf16.msra.mxu0 %v731
        %1018 = vmatpush.bf16.msra.mxu0 %v729
        %1019 = vmatpush.bf16.msra.mxu0 %v727
        %1020 = vmatpush.bf16.msra.mxu0 %v725
        %1021 = vmatpush.bf16.msra.mxu0 %v723
        %1022 = vmatpush.bf16.msra.mxu0 %v721
        %1023 = vmatpush.bf16.msra.mxu0 %v719
        %1024 = vmatmul.bf16.gmra.mxu0 %v313
        %v1025 = vpop.f32.mrf.mxu0
        %v1026 = vadd.f32 %v421, %v1025
        %v1027 = vpop.f32.mrf.mxu0
        %v1028 = vadd.f32 %v421, %v1027
        %1029 = vdwg.mxu0
        %1030 = vmatpush.bf16.msra.mxu0 %v749
        %1031 = vmatpush.bf16.msra.mxu0 %v747
        %1032 = vmatpush.bf16.msra.mxu0 %v745
        %1033 = vmatpush.bf16.msra.mxu0 %v743
        %1034 = vmatpush.bf16.msra.mxu0 %v741
        %1035 = vmatpush.bf16.msra.mxu0 %v739
        %1036 = vmatpush.bf16.msra.mxu0 %v737
        %1037 = vmatpush.bf16.msra.mxu0 %v735
        %1038 = vmatmul.bf16.gmra.mxu0 %v314
        %v1039 = vpop.f32.mrf.mxu0
        %v1040 = vadd.f32 %v1026, %v1039
        %v1041 = vpop.f32.mrf.mxu0
        %v1042 = vadd.f32 %v1028, %v1041
        %1043 = vdwg.mxu0
        %1044 = vmatpush.bf16.msra.mxu0 %v765
        %1045 = vmatpush.bf16.msra.mxu0 %v763
        %1046 = vmatpush.bf16.msra.mxu0 %v761
        %1047 = vmatpush.bf16.msra.mxu0 %v759
        %1048 = vmatpush.bf16.msra.mxu0 %v757
        %1049 = vmatpush.bf16.msra.mxu0 %v755
        %1050 = vmatpush.bf16.msra.mxu0 %v753
        %1051 = vmatpush.bf16.msra.mxu0 %v751
        %1052 = vmatmul.bf16.gmra.mxu0 %v315
        %v1053 = vpop.f32.mrf.mxu0
        %v1054 = vadd.f32 %v1040, %v1053
        %v1055 = vpop.f32.mrf.mxu0
        %v1056 = vadd.f32 %v1042, %v1055
        %1057 = vdwg.mxu0
        %1058 = vmatpush.bf16.msra.mxu0 %v781
        %1059 = vmatpush.bf16.msra.mxu0 %v779
        %1060 = vmatpush.bf16.msra.mxu0 %v777
        %1061 = vmatpush.bf16.msra.mxu0 %v775
        %1062 = vmatpush.bf16.msra.mxu0 %v773
        %1063 = vmatpush.bf16.msra.mxu0 %v771
        %1064 = vmatpush.bf16.msra.mxu0 %v769
        %1065 = vmatpush.bf16.msra.mxu0 %v767
        %1066 = vmatmul.bf16.gmra.mxu0 %v316
        %v1067 = vpop.f32.mrf.mxu0
        %v1068 = vadd.f32 %v1054, %v1067
        %v1069 = vpop.f32.mrf.mxu0
        %v1070 = vadd.f32 %v1056, %v1069
        %1071 = vdwg.mxu0
        %1072 = vmatpush.bf16.msra.mxu0 %v797
        %1073 = vmatpush.bf16.msra.mxu0 %v795
        %1074 = vmatpush.bf16.msra.mxu0 %v793
        %1075 = vmatpush.bf16.msra.mxu0 %v791
        %1076 = vmatpush.bf16.msra.mxu0 %v789
        %1077 = vmatpush.bf16.msra.mxu0 %v787
        %1078 = vmatpush.bf16.msra.mxu0 %v785
        %1079 = vmatpush.bf16.msra.mxu0 %v783
        %1080 = vmatmul.bf16.gmra.mxu0 %v317
        %v1081 = vpop.f32.mrf.mxu0
        %v1082 = vadd.f32 %v1068, %v1081
        %v1083 = vpop.f32.mrf.mxu0
        %v1084 = vadd.f32 %v1070, %v1083
        %1085 = vdwg.mxu0
        %1086 = vmatpush.bf16.msra.mxu0 %v813
        %1087 = vmatpush.bf16.msra.mxu0 %v811
        %1088 = vmatpush.bf16.msra.mxu0 %v809
        %1089 = vmatpush.bf16.msra.mxu0 %v807
        %1090 = vmatpush.bf16.msra.mxu0 %v805
        %1091 = vmatpush.bf16.msra.mxu0 %v803
        %1092 = vmatpush.bf16.msra.mxu0 %v801
        %1093 = vmatpush.bf16.msra.mxu0 %v799
        %1094 = vmatmul.bf16.gmra.mxu0 %v318
        %v1095 = vpop.f32.mrf.mxu0
        %v1096 = vadd.f32 %v1082, %v1095
        %v1097 = vpop.f32.mrf.mxu0
        %v1098 = vadd.f32 %v1084, %v1097
        %1099 = vdwg.mxu0
        %1100 = vmatpush.bf16.msra.mxu0 0
        %1101 = vmatpush.bf16.msra.mxu0 0
        %1102 = vmatpush.bf16.msra.mxu0 0
        %1103 = vmatpush.bf16.msra.mxu0 0
        %1104 = vmatpush.bf16.msra.mxu0 0
        %1105 = vmatpush.bf16.msra.mxu0 0
        %1106 = vmatpush.bf16.msra.mxu0 0
        %1107 = vmatpush.bf16.msra.mxu0 %v815
        %1108 = vmatmul.bf16.gmra.mxu0 %v916
        %v1109 = vpop.f32.mrf.mxu0
        %v1110 = vadd.f32 %v1096, %v1109
        %v1111 = vpop.f32.mrf.mxu0
        %v1112 = vadd.f32 %v1098, %v1111
        %1113 = vdwg.mxu0
        %v1114 = vmax.f32 %v1012, 0.0
        %v1115 = vmax.f32 %v1110, 0.0
        %v1116 = vmax.f32 %v1014, 0.0
        %v1117 = vmax.f32 %v1112, 0.0
        %v1118 = vpack.c.bf16 %v1116, %v1114
        %v1119 = vpack.c.bf16 %v1117, %v1115
        %v1120 = vld [vmem:[#allocation7] sm:$0xf]
        %v1121 = vld [vmem:[#allocation7 + $0x4] sm:$0xf]
        %v1122 = vld [vmem:[#allocation7 + $0x8] sm:$0xf]
        %v1123 = vld [vmem:[#allocation7 + $0xc] sm:$0xf]
        %v1124 = vld [vmem:[#allocation7 + $0x10] sm:$0xf]
        %v1125 = vld [vmem:[#allocation7 + $0x14] sm:$0xf]
        %v1126 = vld [vmem:[#allocation7 + $0x18] sm:$0xf]
        %v1127 = vld [vmem:[#allocation7 + $0x1c] sm:$0xf]
        %v1128 = vld [vmem:[#allocation7 + $0x20] sm:$0xf]
        %v1129 = vld [vmem:[#allocation7 + $0x24] sm:$0xf]
        %v1130 = vld [vmem:[#allocation7 + $0x28] sm:$0xf]
        %v1131 = vld [vmem:[#allocation7 + $0x2c] sm:$0xf]
        %v1132 = vld [vmem:[#allocation7 + $0x30] sm:$0xf]
        %v1133 = vld [vmem:[#allocation7 + $0x34] sm:$0xf]
        %v1134 = vld [vmem:[#allocation7 + $0x38] sm:$0xf]
        %v1135 = vld [vmem:[#allocation7 + $0x3c] sm:$0xf]
        %v1136 = vld [vmem:[#allocation7 + $0x40] sm:$0xf]
        %v1137 = vld [vmem:[#allocation7 + $0x44] sm:$0xf]
        %v1138 = vld [vmem:[#allocation7 + $0x48] sm:$0xf]
        %v1139 = vld [vmem:[#allocation7 + $0x4c] sm:$0xf]
        %v1140 = vld [vmem:[#allocation7 + $0x50] sm:$0xf]
        %v1141 = vld [vmem:[#allocation7 + $0x54] sm:$0xf]
        %v1142 = vld [vmem:[#allocation7 + $0x58] sm:$0xf]
        %v1143 = vld [vmem:[#allocation7 + $0x5c] sm:$0xf]
        %v1144 = vld [vmem:[#allocation7 + $0x60] sm:$0xf]
        %v1145 = vld [vmem:[#allocation7 + $0x64] sm:$0xf]
        %v1146 = vld [vmem:[#allocation7 + $0x68] sm:$0xf]
        %v1147 = vld [vmem:[#allocation7 + $0x6c] sm:$0xf]
        %v1148 = vld [vmem:[#allocation7 + $0x70] sm:$0xf]
        %v1149 = vld [vmem:[#allocation7 + $0x74] sm:$0xf]
        %v1150 = vld [vmem:[#allocation7 + $0x78] sm:$0xf]
        %v1151 = vld [vmem:[#allocation7 + $0x7c] sm:$0xf]
        %v1152 = vld [vmem:[%s4] sm:$0x1]
        %v1154 = vperm.slane %v1152, 0
        %v1188 = vunpack.c.l.b16 %v1120
        %v1189 = vunpack.c.l.b16 %v1121
        %v1190 = vunpack.c.l.b16 %v1122
        %v1191 = vunpack.c.l.b16 %v1123
        %v1192 = vunpack.c.l.b16 %v1124
        %v1193 = vunpack.c.l.b16 %v1125
        %v1194 = vunpack.c.l.b16 %v1126
        %v1195 = vunpack.c.l.b16 %v1127
        %v1196 = vunpack.c.l.b16 %v1128
        %v1197 = vunpack.c.l.b16 %v1129
        %v1198 = vunpack.c.l.b16 %v1130
        %v1199 = vunpack.c.l.b16 %v1131
        %v1200 = vunpack.c.l.b16 %v1132
        %v1201 = vunpack.c.l.b16 %v1133
        %v1202 = vunpack.c.l.b16 %v1134
        %v1203 = vunpack.c.l.b16 %v1135
        %v1204 = vunpack.c.l.b16 %v1136
        %v1205 = vunpack.c.l.b16 %v1137
        %v1206 = vunpack.c.l.b16 %v1138
        %v1207 = vunpack.c.l.b16 %v1139
        %v1208 = vunpack.c.l.b16 %v1140
        %v1209 = vunpack.c.l.b16 %v1141
        %v1210 = vunpack.c.l.b16 %v1142
        %v1211 = vunpack.c.l.b16 %v1143
        %v1212 = vunpack.c.l.b16 %v1144
        %v1213 = vunpack.c.l.b16 %v1145
        %v1214 = vunpack.c.l.b16 %v1146
        %v1215 = vunpack.c.l.b16 %v1147
        %v1216 = vunpack.c.l.b16 %v1148
        %v1217 = vunpack.c.l.b16 %v1149
        %v1218 = vunpack.c.l.b16 %v1150
        %v1219 = vunpack.c.l.b16 %v1151
        %v1220 = vpack.c.b16 %v1189, %v1188
        %v1221 = vpack.c.b16 %v1191, %v1190
        %v1222 = vpack.c.b16 %v1193, %v1192
        %v1223 = vpack.c.b16 %v1195, %v1194
        %v1224 = vpack.c.b16 %v1197, %v1196
        %v1225 = vpack.c.b16 %v1199, %v1198
        %v1226 = vpack.c.b16 %v1201, %v1200
        %v1227 = vpack.c.b16 %v1203, %v1202
        %v1228 = vpack.c.b16 %v1205, %v1204
        %v1229 = vpack.c.b16 %v1207, %v1206
        %v1230 = vpack.c.b16 %v1209, %v1208
        %v1231 = vpack.c.b16 %v1211, %v1210
        %v1232 = vpack.c.b16 %v1213, %v1212
        %v1233 = vpack.c.b16 %v1215, %v1214
        %v1234 = vpack.c.b16 %v1217, %v1216
        %v1235 = vpack.c.b16 %v1219, %v1218
        %1252 = vmatpush.bf16.msra.mxu0 %v1227
        %1253 = vmatpush.bf16.msra.mxu0 %v1226
        %1254 = vmatpush.bf16.msra.mxu0 %v1225
        %1255 = vmatpush.bf16.msra.mxu0 %v1224
        %1256 = vmatpush.bf16.msra.mxu0 %v1223
        %1257 = vmatpush.bf16.msra.mxu0 %v1222
        %1258 = vmatpush.bf16.msra.mxu0 %v1221
        %1259 = vmatpush.bf16.msra.mxu0 %v1220
        %1260 = vmatmul.bf16.gmra.mxu0 %v1118
        %v1261 = vpop.f32.mrf.mxu0
        %v1262 = vadd.f32 %v1154, %v1261
        %v1263 = vpop.f32.mrf.mxu0
        %v1264 = vadd.f32 %v1154, %v1263
        %1265 = vdwg.mxu0
        %1266 = vmatpush.bf16.msra.mxu0 %v1235
        %1267 = vmatpush.bf16.msra.mxu0 %v1234
        %1268 = vmatpush.bf16.msra.mxu0 %v1233
        %1269 = vmatpush.bf16.msra.mxu0 %v1232
        %1270 = vmatpush.bf16.msra.mxu0 %v1231
        %1271 = vmatpush.bf16.msra.mxu0 %v1230
        %1272 = vmatpush.bf16.msra.mxu0 %v1229
        %1273 = vmatpush.bf16.msra.mxu0 %v1228
        %1274 = vmatmul.bf16.gmra.mxu0 %v1119
        %v1275 = vpop.f32.mrf.mxu0
        %v1276 = vadd.f32 %v1262, %v1275
        %v1277 = vpop.f32.mrf.mxu0
        %v1278 = vadd.f32 %v1264, %v1277
        %1279 = vdwg.mxu0
        %vm1280 = vcmask 80896
        %1281 = vst.msk [vmem:[%s296] sm:$0xff] %vm1280, %v1276
        %1282 = vst.msk [vmem:[%s296 + $0x8] sm:$0xff] %vm1280, %v1278
        %s1283 = smul.u32 2, %s21
        %p1284 = scmp.lt.s32.totalorder %s1283, 3
        %s1285 = scalar_select %p1284, %s1283, 3
        %s1286 = smul.addr %s1285, 8
        %s1287 = scalar_lea.vmem %s5, %s1286
        // Predicated region
        $region57: #{mlp_forward.1} parent=39 // pred_check
          %p1288 = pneg %p149
        $region58: #{mlp_forward.1} parent=39 // pred_check_branch
          %1290 = sbr.rel (%p1288) target = $region60
        $region59: #{mlp_forward.1} parent=39 // pred_region
          %s1291 = smul.u32 2, %s21
        $region60: #{mlp_forward.1} parent=39 // pred_fallthru
          _
      $region40: #{mlp_forward.1} parent=5 // pred_fallthru
        _
      %p1292 = scmp.le.s32.totalorder 2, %s16
      // Predicated region
      $region61: #{mlp_forward.1} parent=5 // pred_check
        %p1293 = pneg %p1292
      $region62: #{mlp_forward.1} parent=5 // pred_check_branch
        %1295 = sbr.rel (%p1293) target = $region64
      $region63: #{mlp_forward.1} parent=5 // pred_region
        %s1296 = ssub.s32 %s16, 2
        // Predicated region
        $region65: #{mlp_forward.1} parent=63 // pred_check
          %p1297 = pneg %p155
        $region66: #{mlp_forward.1} parent=63 // pred_check_branch
          %1299 = sbr.rel (%p1297) target = $region68
        $region67: #{mlp_forward.1} parent=63 // pred_region
          %s1300 = smul.u32 2, %s22
          %p1301 = scmp.lt.s32.totalorder %s1300, 3
          %s1302 = scalar_select %p1301, %s1300, 3
          %s1303 = smul.addr %s1302, 8
          %s1304 = scalar_lea.vmem %s5, %s1303
        $region68: #{mlp_forward.1} parent=63 // pred_fallthru
          _
      $region64: #{mlp_forward.1} parent=5 // pred_fallthru
        _
    $region6: #{mlp_forward.1} parent=1 // loop_footer
      %s20 = sadd.s32 1, %s16
    $region7: #{mlp_forward.1} parent=1 // loop_footer_branch
      %15 = sbr.rel target = $region3
    $region8: #{mlp_forward.1} parent=1 // loop_exit
      _
    %1305 = vsyncpa [#allocation3], 1
    %s1306 = scalar_lea.sflag [#allocation3], 1
    %1307 = vsyncpa %s1306, 1
    %1308 = vsyncpa [#allocation5], 1
    %1309 = vsyncpa [#allocation8], 1

</llo_original>
